<compile_context>
chip_gen: v6e
topology: v6e:2x2x1
jax: 0.10.0
libtpu: 0.0.40
codegen_flags: <defaults>
</compile_context>

<pallas_src>
import functools

import jax
import jax.numpy as jnp
from jax.experimental import pallas as pl
from jax.experimental.pallas import tpu as pltpu

IN_CH = 3          # in_chn=3
WF = 16            # wf=16
RELU_SLOPE = 0.2   # relu_slope=0.2

# ---- packed-slab layout (row offsets are 8/16-aligned for f32/bf16 tiles) ----
R_EC = 0                        # fused embed+cond weight: rows [0, 32)
R_QKV = 2 * WF                  # qkv weight:              rows [32, 80)
R_PROJ = R_QKV + 3 * WF         # proj weight:             rows [80, 96)
R_OUT = R_PROJ + WF             # out-conv weight:         rows [96, 99)
SLAB_ROWS = 112                 # padded to a multiple of 16 (bf16 sublane tile)
SLAB_COLS = 128                 # one full lane group


# --------------------------------------------------------------------------
# Fused Restormer-lite kernel: the whole forward in one grid-less invocation.
# --------------------------------------------------------------------------
def _restormer_kernel(x_ref, w_ref, b_ref, t_ref, o_ref, *, batch, hw):
    x = x_ref[...]                                  # (Cin, B*HW) f32
    xb = x.astype(jnp.bfloat16)

    w = w_ref[...]                                  # (112, 128) bf16 — 1 DMA
    bias = b_ref[...]                               # (112, 1)  f32  — 1 DMA

    # Static, aligned slices out of the packed slabs (no runtime cost).
    ec_w = w[R_EC:R_EC + 2 * WF, :IN_CH]            # (2WF, Cin)
    qkv_w = w[R_QKV:R_QKV + 3 * WF, :WF]            # (3WF, WF)
    proj_w = w[R_PROJ:R_PROJ + WF, :WF]             # (WF, WF)
    out_w = w[R_OUT:R_OUT + IN_CH, :WF]             # (Cin, WF)

    ec_b = bias[R_EC:R_EC + 2 * WF]                 # (2WF, 1)
    qkv_b = bias[R_QKV:R_QKV + 3 * WF]              # (3WF, 1)
    proj_b = bias[R_PROJ:R_PROJ + WF]               # (WF, 1)
    out_b = bias[R_OUT:R_OUT + IN_CH]               # (Cin, 1)

    # --- shallow feature: fused embed+cond 1x1 conv (one MXU push) ----------
    ec = jnp.dot(ec_w, xb, preferred_element_type=jnp.float32) + ec_b  # (2WF, N)
    emb = ec[:WF]
    emb = jnp.where(emb >= 0.0, emb, RELU_SLOPE * emb)   # LeakyReLU(0.2)
    f = emb + ec[WF:]                                    # (WF, N) f32

    # --- MDTA transposed (channel) attention --------------------------------
    qkv = jnp.dot(qkv_w, f.astype(jnp.bfloat16),
                  preferred_element_type=jnp.float32) + qkv_b          # (3WF, N)
    q = qkv[:WF]
    k = qkv[WF:2 * WF]
    v_bf = qkv[2 * WF:].astype(jnp.bfloat16)             # cast once, sliced below

    t = t_ref[0, 0]
    av_parts = []
    for s in range(batch):                               # tiny static B: unrolled
        lo = s * hw                                      # 128-aligned lane offset
        qb = q[:, lo:lo + hw]
        kb = k[:, lo:lo + hw]
        vb = v_bf[:, lo:lo + hw]
        qn = qb * jax.lax.rsqrt(jnp.sum(qb * qb, axis=-1, keepdims=True) + 1e-6)
        kn = kb * jax.lax.rsqrt(jnp.sum(kb * kb, axis=-1, keepdims=True) + 1e-6)
        # (WF, WF) channel-attention matrix: contract over this sample's HW.
        attn = jax.lax.dot_general(qn.astype(jnp.bfloat16), kn.astype(jnp.bfloat16),
                                   (((1,), (1,)), ((), ())),
                                   preferred_element_type=jnp.float32) * t
        attn = attn - jnp.max(attn, axis=-1, keepdims=True)
        p = jnp.exp(attn)
        p = p * pl.reciprocal(jnp.sum(p, axis=-1, keepdims=True) + 1e-6, approx=True)
        av_parts.append(jnp.dot(p.astype(jnp.bfloat16), vb,
                                preferred_element_type=jnp.float32))   # (WF, HW)
    av = jnp.concatenate(av_parts, axis=-1) if batch > 1 else av_parts[0]

    # --- projection + residual ----------------------------------------------
    f = f + jnp.dot(proj_w, av.astype(jnp.bfloat16),
                    preferred_element_type=jnp.float32) + proj_b

    # --- output conv + global residual with the input ------------------------
    out = jnp.dot(out_w, f.astype(jnp.bfloat16),
                  preferred_element_type=jnp.float32) + out_b + x
    o_ref[...] = out.astype(o_ref.dtype)                 # (Cin, B*HW), lane-dense


def cyclic_classifier_forward(packed, x):
    """forward(x): out = generator(x, x) with a Restormer-style generator."""
    B, Cin, H, W = x.shape
    HW = H * W
    N = B * HW
    # (B, Cin, H, W) -> (Cin, B*HW): 1x1 convs fuse across batch; each sample's
    # columns stay contiguous and 128-lane aligned for the per-sample attention.
    xf = jnp.transpose(x.reshape(B, Cin, HW), (1, 0, 2)).reshape(Cin, N)

    kernel = functools.partial(_restormer_kernel, batch=B, hw=HW)
    out = pl.pallas_call(
        kernel,
        out_shape=jax.ShapeDtypeStruct((Cin, N), x.dtype),
        in_specs=[
            pl.BlockSpec(memory_space=pltpu.MemorySpace.VMEM),   # x (Cin, B*HW)
            pl.BlockSpec(memory_space=pltpu.MemorySpace.VMEM),   # bf16 weight slab
            pl.BlockSpec(memory_space=pltpu.MemorySpace.VMEM),   # f32  bias slab
            pl.BlockSpec(memory_space=pltpu.MemorySpace.SMEM),   # temperature
        ],
        out_specs=pl.BlockSpec(memory_space=pltpu.MemorySpace.VMEM),
    )(xf, packed["w_slab"], packed["b_slab"], packed["temperature"])
    return jnp.transpose(out.reshape(Cin, B, HW), (1, 0, 2)).reshape(B, Cin, H, W)


# --------------------------------------------------------------------------
# Parameter init (deterministic stand-in; biases start at 0 per _initialize)
# and one-time packing into the two DMA slabs.
# --------------------------------------------------------------------------
def init_params(key):
    ks = jax.random.split(key, 5)

    def w(k, shape, scale):
        # bf16 storage: MXU operands; halves weight DMA bytes.
        return (scale * jax.random.normal(k, shape, jnp.float32)).astype(jnp.bfloat16)

    return {
        "embed_w": w(ks[0], (WF, IN_CH), 0.2),
        "embed_b": jnp.zeros((WF, 1), jnp.float32),
        "cond_w": w(ks[1], (WF, IN_CH), 0.2),
        "cond_b": jnp.zeros((WF, 1), jnp.float32),
        "qkv_w": w(ks[2], (3 * WF, WF), 0.1),
        "qkv_b": jnp.zeros((3 * WF, 1), jnp.float32),
        "temperature": jnp.ones((1, 1), jnp.float32),
        "proj_w": w(ks[3], (WF, WF), 0.1),
        "proj_b": jnp.zeros((WF, 1), jnp.float32),
        "out_w": w(ks[4], (IN_CH, WF), 0.1),
        "out_b": jnp.zeros((IN_CH, 1), jnp.float32),
    }


def pack_params(params):
    """One-time pack: ONE bf16 weight slab + ONE f32 bias slab (2 DMAs total)."""
    w = jnp.zeros((SLAB_ROWS, SLAB_COLS), jnp.bfloat16)
    ec_w = jnp.concatenate([params["embed_w"], params["cond_w"]], axis=0)
    w = w.at[R_EC:R_EC + 2 * WF, :IN_CH].set(ec_w)
    w = w.at[R_QKV:R_QKV + 3 * WF, :WF].set(params["qkv_w"])
    w = w.at[R_PROJ:R_PROJ + WF, :WF].set(params["proj_w"])
    w = w.at[R_OUT:R_OUT + IN_CH, :WF].set(params["out_w"])

    b = jnp.zeros((SLAB_ROWS, 1), jnp.float32)
    ec_b = jnp.concatenate([params["embed_b"], params["cond_b"]], axis=0)
    b = b.at[R_EC:R_EC + 2 * WF].set(ec_b)
    b = b.at[R_QKV:R_QKV + 3 * WF].set(params["qkv_b"])
    b = b.at[R_PROJ:R_PROJ + WF].set(params["proj_b"])
    b = b.at[R_OUT:R_OUT + IN_CH].set(params["out_b"])

    return {"w_slab": w, "b_slab": b, "temperature": params["temperature"]}


# --------------------------------------------------------------------------
# Pure-JAX reference (same math / same bf16 cast points) for a sanity check.
# --------------------------------------------------------------------------
def _reference_forward(p, x):
    B, Cin, H, W = x.shape
    HW = H * W

    def one(xs):                                   # xs: (Cin, HW) f32
        xb = xs.astype(jnp.bfloat16)
        emb = jnp.dot(p["embed_w"], xb,
                      preferred_element_type=jnp.float32) + p["embed_b"]
        emb = jnp.where(emb >= 0.0, emb, RELU_SLOPE * emb)
        cond = jnp.dot(p["cond_w"], xb,
                       preferred_element_type=jnp.float32) + p["cond_b"]
        f = emb + cond
        qkv = jnp.dot(p["qkv_w"], f.astype(jnp.bfloat16),
                      preferred_element_type=jnp.float32) + p["qkv_b"]
        q, k, v = qkv[:WF], qkv[WF:2 * WF], qkv[2 * WF:]
        qn = q * jax.lax.rsqrt(jnp.sum(q * q, -1, keepdims=True) + 1e-6)
        kn = k * jax.lax.rsqrt(jnp.sum(k * k, -1, keepdims=True) + 1e-6)
        attn = jax.lax.dot_general(qn.astype(jnp.bfloat16), kn.astype(jnp.bfloat16),
                                   (((1,), (1,)), ((), ())),
                                   preferred_element_type=jnp.float32)
        attn = attn * p["temperature"][0, 0]
        attn = attn - jnp.max(attn, -1, keepdims=True)
        pw = jnp.exp(attn)
        pw = pw / (jnp.sum(pw, -1, keepdims=True) + 1e-6)
        av = jnp.dot(pw.astype(jnp.bfloat16), v.astype(jnp.bfloat16),
                     preferred_element_type=jnp.float32)
        f2 = f + jnp.dot(p["proj_w"], av.astype(jnp.bfloat16),
                         preferred_element_type=jnp.float32) + p["proj_b"]
        return jnp.dot(p["out_w"], f2.astype(jnp.bfloat16),
                       preferred_element_type=jnp.float32) + p["out_b"] + xs

    return jax.vmap(one)(x.reshape(B, Cin, HW)).reshape(B, Cin, H, W)


if __name__ == "__main__":
    key = jax.random.PRNGKey(0)
    kx, kp = jax.random.split(key)

    B, H, W = 2, 16, 16
    x = jax.random.normal(kx, (B, IN_CH, H, W), dtype=jnp.float32)
    params = init_params(kp)
    packed = jax.tree_util.tree_map(jax.block_until_ready, pack_params(params))

    fwd = jax.jit(cyclic_classifier_forward)
    out = fwd(packed, x)
    jax.block_until_ready(out)

    assert out.shape == (B, IN_CH, H, W)
    assert bool(jnp.all(jnp.isfinite(out)))

    ref = _reference_forward(params, x)
    max_err = float(jnp.max(jnp.abs(out - ref)))
    assert max_err < 2e-2, f"kernel/reference mismatch: {max_err}"

    print("KERNEL_OK")
</pallas_src>

<mosaic_0001>
module attributes {stable_mosaic.version = 11 : i64} {
  func.func @_restormer_kernel(%arg0: memref<3x512xf32, #tpu.memory_space<vmem>>, %arg1: memref<112x128xbf16, #tpu.memory_space<vmem>>, %arg2: memref<112x1xf32, #tpu.memory_space<vmem>>, %arg3: memref<1x1xf32, #tpu.memory_space<smem>>, %arg4: memref<3x512xf32, #tpu.memory_space<vmem>>) attributes {dimension_semantics = [], scalar_prefetch = 0 : i64, scratch_operands = 0 : i64, tpu.core_type = #tpu.core_type<tc>} {
    %c0 = arith.constant 0 : index
    %c0_0 = arith.constant 0 : index
    %0 = vector.load %arg0[%c0, %c0_0] : memref<3x512xf32, #tpu.memory_space<vmem>>, vector<3x512xf32>
    %1 = arith.truncf %0 : vector<3x512xf32> to vector<3x512xbf16>
    %c0_1 = arith.constant 0 : index
    %c0_2 = arith.constant 0 : index
    %2 = vector.load %arg1[%c0_1, %c0_2] : memref<112x128xbf16, #tpu.memory_space<vmem>>, vector<112x128xbf16>
    %c0_3 = arith.constant 0 : index
    %c0_4 = arith.constant 0 : index
    %3 = vector.load %arg2[%c0_3, %c0_4] : memref<112x1xf32, #tpu.memory_space<vmem>>, vector<112x1xf32>
    %4 = vector.extract_strided_slice %2 {offsets = [0, 0], sizes = [32, 3], strides = [1, 1]} : vector<112x128xbf16> to vector<32x3xbf16>
    %5 = vector.extract_strided_slice %2 {offsets = [32, 0], sizes = [48, 16], strides = [1, 1]} : vector<112x128xbf16> to vector<48x16xbf16>
    %6 = vector.extract_strided_slice %2 {offsets = [80, 0], sizes = [16, 16], strides = [1, 1]} : vector<112x128xbf16> to vector<16x16xbf16>
    %7 = vector.extract_strided_slice %2 {offsets = [96, 0], sizes = [3, 16], strides = [1, 1]} : vector<112x128xbf16> to vector<3x16xbf16>
    %8 = vector.extract_strided_slice %3 {offsets = [0, 0], sizes = [32, 1], strides = [1, 1]} : vector<112x1xf32> to vector<32x1xf32>
    %9 = vector.extract_strided_slice %3 {offsets = [32, 0], sizes = [48, 1], strides = [1, 1]} : vector<112x1xf32> to vector<48x1xf32>
    %10 = vector.extract_strided_slice %3 {offsets = [80, 0], sizes = [16, 1], strides = [1, 1]} : vector<112x1xf32> to vector<16x1xf32>
    %11 = vector.extract_strided_slice %3 {offsets = [96, 0], sizes = [3, 1], strides = [1, 1]} : vector<112x1xf32> to vector<3x1xf32>
    %cst = arith.constant dense<0.000000e+00> : vector<32x512xf32>
    %12 = tpu.matmul %4, %1, %cst {dimension_numbers = #tpu.dot_dimension_numbers<[1], [0], [0], [1], [0, 0, 1, 1], [], []>} : vector<32x3xbf16>, vector<3x512xbf16>, vector<32x512xf32> -> vector<32x512xf32>
    %13 = vector.broadcast %8 : vector<32x1xf32> to vector<32x512xf32>
    %14 = arith.addf %12, %13 : vector<32x512xf32>
    %15 = vector.extract_strided_slice %14 {offsets = [0, 0], sizes = [16, 512], strides = [1, 1]} : vector<32x512xf32> to vector<16x512xf32>
    %cst_5 = arith.constant 0.000000e+00 : f32
    %16 = vector.broadcast %cst_5 : f32 to vector<16x512xf32>
    %17 = arith.cmpf oge, %15, %16 : vector<16x512xf32>
    %cst_6 = arith.constant 2.000000e-01 : f32
    %18 = vector.broadcast %cst_6 : f32 to vector<16x512xf32>
    %19 = arith.mulf %18, %15 : vector<16x512xf32>
    %20 = arith.select %17, %15, %19 : vector<16x512xi1>, vector<16x512xf32>
    %21 = vector.extract_strided_slice %14 {offsets = [16, 0], sizes = [16, 512], strides = [1, 1]} : vector<32x512xf32> to vector<16x512xf32>
    %22 = arith.addf %20, %21 : vector<16x512xf32>
    %23 = arith.truncf %22 : vector<16x512xf32> to vector<16x512xbf16>
    %cst_7 = arith.constant dense<0.000000e+00> : vector<48x512xf32>
    %24 = tpu.matmul %5, %23, %cst_7 {dimension_numbers = #tpu.dot_dimension_numbers<[1], [0], [0], [1], [0, 0, 1, 1], [], []>} : vector<48x16xbf16>, vector<16x512xbf16>, vector<48x512xf32> -> vector<48x512xf32>
    %25 = vector.broadcast %9 : vector<48x1xf32> to vector<48x512xf32>
    %26 = arith.addf %24, %25 : vector<48x512xf32>
    %27 = vector.extract_strided_slice %26 {offsets = [0, 0], sizes = [16, 512], strides = [1, 1]} : vector<48x512xf32> to vector<16x512xf32>
    %28 = vector.extract_strided_slice %26 {offsets = [16, 0], sizes = [16, 512], strides = [1, 1]} : vector<48x512xf32> to vector<16x512xf32>
    %29 = vector.extract_strided_slice %26 {offsets = [32, 0], sizes = [16, 512], strides = [1, 1]} : vector<48x512xf32> to vector<16x512xf32>
    %30 = arith.truncf %29 : vector<16x512xf32> to vector<16x512xbf16>
    %c0_8 = arith.constant 0 : index
    %c0_9 = arith.constant 0 : index
    %31 = memref.load %arg3[%c0_8, %c0_9] : memref<1x1xf32, #tpu.memory_space<smem>>
    %32 = vector.extract_strided_slice %27 {offsets = [0, 0], sizes = [16, 256], strides = [1, 1]} : vector<16x512xf32> to vector<16x256xf32>
    %33 = vector.extract_strided_slice %28 {offsets = [0, 0], sizes = [16, 256], strides = [1, 1]} : vector<16x512xf32> to vector<16x256xf32>
    %34 = vector.extract_strided_slice %30 {offsets = [0, 0], sizes = [16, 256], strides = [1, 1]} : vector<16x512xbf16> to vector<16x256xbf16>
    %35 = arith.mulf %32, %32 : vector<16x256xf32>
    %cst_10 = arith.constant dense<0.000000e+00> : vector<16xf32>
    %36 = vector.multi_reduction <add>, %35, %cst_10 [1] : vector<16x256xf32> to vector<16xf32>
    %37 = vector.shape_cast %36 : vector<16xf32> to vector<16x1xf32>
    %cst_11 = arith.constant 9.99999997E-7 : f32
    %38 = vector.broadcast %cst_11 : f32 to vector<16x1xf32>
    %39 = arith.addf %37, %38 : vector<16x1xf32>
    %40 = math.rsqrt %39 : vector<16x1xf32>
    %41 = vector.broadcast %40 : vector<16x1xf32> to vector<16x256xf32>
    %42 = arith.mulf %32, %41 : vector<16x256xf32>
    %43 = arith.mulf %33, %33 : vector<16x256xf32>
    %cst_12 = arith.constant dense<0.000000e+00> : vector<16xf32>
    %44 = vector.multi_reduction <add>, %43, %cst_12 [1] : vector<16x256xf32> to vector<16xf32>
    %45 = vector.shape_cast %44 : vector<16xf32> to vector<16x1xf32>
    %cst_13 = arith.constant 9.99999997E-7 : f32
    %46 = vector.broadcast %cst_13 : f32 to vector<16x1xf32>
    %47 = arith.addf %45, %46 : vector<16x1xf32>
    %48 = math.rsqrt %47 : vector<16x1xf32>
    %49 = vector.broadcast %48 : vector<16x1xf32> to vector<16x256xf32>
    %50 = arith.mulf %33, %49 : vector<16x256xf32>
    %51 = arith.truncf %42 : vector<16x256xf32> to vector<16x256xbf16>
    %52 = arith.truncf %50 : vector<16x256xf32> to vector<16x256xbf16>
    %cst_14 = arith.constant dense<0.000000e+00> : vector<16x16xf32>
    %53 = tpu.matmul %51, %52, %cst_14 {dimension_numbers = #tpu.dot_dimension_numbers<[1], [1], [0], [0], [0, 0, 1, 0], [], []>} : vector<16x256xbf16>, vector<16x256xbf16>, vector<16x16xf32> -> vector<16x16xf32>
    %54 = vector.broadcast %31 : f32 to vector<16x16xf32>
    %55 = arith.mulf %53, %54 : vector<16x16xf32>
    %cst_15 = arith.constant dense<0xFF800000> : vector<16xf32>
    %56 = vector.multi_reduction <maximumf>, %55, %cst_15 [1] : vector<16x16xf32> to vector<16xf32>
    %57 = vector.shape_cast %56 : vector<16xf32> to vector<16x1xf32>
    %58 = vector.broadcast %57 : vector<16x1xf32> to vector<16x16xf32>
    %59 = arith.subf %55, %58 : vector<16x16xf32>
    %60 = math.exp %59 : vector<16x16xf32>
    %cst_16 = arith.constant dense<0.000000e+00> : vector<16xf32>
    %61 = vector.multi_reduction <add>, %60, %cst_16 [1] : vector<16x16xf32> to vector<16xf32>
    %62 = vector.shape_cast %61 : vector<16xf32> to vector<16x1xf32>
    %cst_17 = arith.constant 9.99999997E-7 : f32
    %63 = vector.broadcast %cst_17 : f32 to vector<16x1xf32>
    %64 = arith.addf %62, %63 : vector<16x1xf32>
    %65 = tpu.reciprocal %64 {approx = true} : vector<16x1xf32> -> vector<16x1xf32>
    %66 = vector.broadcast %65 : vector<16x1xf32> to vector<16x16xf32>
    %67 = arith.mulf %60, %66 : vector<16x16xf32>
    %68 = arith.truncf %67 : vector<16x16xf32> to vector<16x16xbf16>
    %cst_18 = arith.constant dense<0.000000e+00> : vector<16x256xf32>
    %69 = tpu.matmul %68, %34, %cst_18 {dimension_numbers = #tpu.dot_dimension_numbers<[1], [0], [0], [1], [0, 0, 1, 1], [], []>} : vector<16x16xbf16>, vector<16x256xbf16>, vector<16x256xf32> -> vector<16x256xf32>
    %70 = vector.extract_strided_slice %27 {offsets = [0, 256], sizes = [16, 256], strides = [1, 1]} : vector<16x512xf32> to vector<16x256xf32>
    %71 = vector.extract_strided_slice %28 {offsets = [0, 256], sizes = [16, 256], strides = [1, 1]} : vector<16x512xf32> to vector<16x256xf32>
    %72 = vector.extract_strided_slice %30 {offsets = [0, 256], sizes = [16, 256], strides = [1, 1]} : vector<16x512xbf16> to vector<16x256xbf16>
    %73 = arith.mulf %70, %70 : vector<16x256xf32>
    %cst_19 = arith.constant dense<0.000000e+00> : vector<16xf32>
    %74 = vector.multi_reduction <add>, %73, %cst_19 [1] : vector<16x256xf32> to vector<16xf32>
    %75 = vector.shape_cast %74 : vector<16xf32> to vector<16x1xf32>
    %cst_20 = arith.constant 9.99999997E-7 : f32
    %76 = vector.broadcast %cst_20 : f32 to vector<16x1xf32>
    %77 = arith.addf %75, %76 : vector<16x1xf32>
    %78 = math.rsqrt %77 : vector<16x1xf32>
    %79 = vector.broadcast %78 : vector<16x1xf32> to vector<16x256xf32>
    %80 = arith.mulf %70, %79 : vector<16x256xf32>
    %81 = arith.mulf %71, %71 : vector<16x256xf32>
    %cst_21 = arith.constant dense<0.000000e+00> : vector<16xf32>
    %82 = vector.multi_reduction <add>, %81, %cst_21 [1] : vector<16x256xf32> to vector<16xf32>
    %83 = vector.shape_cast %82 : vector<16xf32> to vector<16x1xf32>
    %cst_22 = arith.constant 9.99999997E-7 : f32
    %84 = vector.broadcast %cst_22 : f32 to vector<16x1xf32>
    %85 = arith.addf %83, %84 : vector<16x1xf32>
    %86 = math.rsqrt %85 : vector<16x1xf32>
    %87 = vector.broadcast %86 : vector<16x1xf32> to vector<16x256xf32>
    %88 = arith.mulf %71, %87 : vector<16x256xf32>
    %89 = arith.truncf %80 : vector<16x256xf32> to vector<16x256xbf16>
    %90 = arith.truncf %88 : vector<16x256xf32> to vector<16x256xbf16>
    %cst_23 = arith.constant dense<0.000000e+00> : vector<16x16xf32>
    %91 = tpu.matmul %89, %90, %cst_23 {dimension_numbers = #tpu.dot_dimension_numbers<[1], [1], [0], [0], [0, 0, 1, 0], [], []>} : vector<16x256xbf16>, vector<16x256xbf16>, vector<16x16xf32> -> vector<16x16xf32>
    %92 = vector.broadcast %31 : f32 to vector<16x16xf32>
    %93 = arith.mulf %91, %92 : vector<16x16xf32>
    %cst_24 = arith.constant dense<0xFF800000> : vector<16xf32>
    %94 = vector.multi_reduction <maximumf>, %93, %cst_24 [1] : vector<16x16xf32> to vector<16xf32>
    %95 = vector.shape_cast %94 : vector<16xf32> to vector<16x1xf32>
    %96 = vector.broadcast %95 : vector<16x1xf32> to vector<16x16xf32>
    %97 = arith.subf %93, %96 : vector<16x16xf32>
    %98 = math.exp %97 : vector<16x16xf32>
    %cst_25 = arith.constant dense<0.000000e+00> : vector<16xf32>
    %99 = vector.multi_reduction <add>, %98, %cst_25 [1] : vector<16x16xf32> to vector<16xf32>
    %100 = vector.shape_cast %99 : vector<16xf32> to vector<16x1xf32>
    %cst_26 = arith.constant 9.99999997E-7 : f32
    %101 = vector.broadcast %cst_26 : f32 to vector<16x1xf32>
    %102 = arith.addf %100, %101 : vector<16x1xf32>
    %103 = tpu.reciprocal %102 {approx = true} : vector<16x1xf32> -> vector<16x1xf32>
    %104 = vector.broadcast %103 : vector<16x1xf32> to vector<16x16xf32>
    %105 = arith.mulf %98, %104 : vector<16x16xf32>
    %106 = arith.truncf %105 : vector<16x16xf32> to vector<16x16xbf16>
    %cst_27 = arith.constant dense<0.000000e+00> : vector<16x256xf32>
    %107 = tpu.matmul %106, %72, %cst_27 {dimension_numbers = #tpu.dot_dimension_numbers<[1], [0], [0], [1], [0, 0, 1, 1], [], []>} : vector<16x16xbf16>, vector<16x256xbf16>, vector<16x256xf32> -> vector<16x256xf32>
    %108 = tpu.concatenate %69, %107 in 1 : vector<16x256xf32>, vector<16x256xf32> -> vector<16x512xf32>
    %109 = arith.truncf %108 : vector<16x512xf32> to vector<16x512xbf16>
    %cst_28 = arith.constant dense<0.000000e+00> : vector<16x512xf32>
    %110 = tpu.matmul %6, %109, %cst_28 {dimension_numbers = #tpu.dot_dimension_numbers<[1], [0], [0], [1], [0, 0, 1, 1], [], []>} : vector<16x16xbf16>, vector<16x512xbf16>, vector<16x512xf32> -> vector<16x512xf32>
    %111 = arith.addf %22, %110 : vector<16x512xf32>
    %112 = vector.broadcast %10 : vector<16x1xf32> to vector<16x512xf32>
    %113 = arith.addf %111, %112 : vector<16x512xf32>
    %114 = arith.truncf %113 : vector<16x512xf32> to vector<16x512xbf16>
    %cst_29 = arith.constant dense<0.000000e+00> : vector<3x512xf32>
    %115 = tpu.matmul %7, %114, %cst_29 {dimension_numbers = #tpu.dot_dimension_numbers<[1], [0], [0], [1], [0, 0, 1, 1], [], []>} : vector<3x16xbf16>, vector<16x512xbf16>, vector<3x512xf32> -> vector<3x512xf32>
    %116 = vector.broadcast %11 : vector<3x1xf32> to vector<3x512xf32>
    %117 = arith.addf %115, %116 : vector<3x512xf32>
    %118 = arith.addf %117, %0 : vector<3x512xf32>
    %c0_30 = arith.constant 0 : index
    %c0_31 = arith.constant 0 : index
    %119 = vector.load %arg4[%c0_30, %c0_31] : memref<3x512xf32, #tpu.memory_space<vmem>>, vector<3x512xf32>
    tpu.vector_store %arg4[%c0_30, %c0_31], %118 {strides = array<i32>} : memref<3x512xf32, #tpu.memory_space<vmem>>, vector<3x512xf32>,
    return
  }
}

</mosaic_0001>

<llo_original>
// kernel: cyclic_classifier_forward.1
$region0: #{cyclic_classifier_forward.1}
  #allocation0 [shape = 'u32[]', space=smem, size = 0x4, offset = 0x4, fixed_abs, tag = 'smem constant byte address 0x4 - core index']
  #allocation1 [shape = 'u32[144,128]{1,0:T(1,128)}', space=vmem, size = 0x12000, scoped, tag = 'internal scratch']
  #allocation2 [shape = 'f32[1,1]{1,0:T(1,128)S(6)}', space=smem, size = 0x200, scoped, tag = 'scoped memory for cyclic_classifier_forward.1']
  %s0 = inlined_call_operand.vmem [shape: f32[3,512], index: 0, kind: input, shape index: {}]
  %s1 = inlined_call_operand.vmem [shape: bf16[112,128], index: 1, kind: input, shape index: {}]
  %s2 = inlined_call_operand.vmem [shape: f32[112,1], index: 2, kind: input, shape index: {}]
  %s3 = inlined_call_operand.<no memory space> [shape: f32[1,1], index: 3, kind: input, shape index: {}]
  %s4 = inlined_call_operand.vmem [shape: f32[3,512], index: 4, kind: output, shape index: {}]
  %s5 = sld [smem:[#allocation0]]
  $region26: #{cyclic_classifier_forward.1} parent=0
    _
  %s7 = ssub.s32 1, %s5
  %s8 = scalar_select 0, %s7, %s5
  %9 = sst [smem:[#allocation2]] %s3
  // Predicated region
  $region2: #{cyclic_classifier_forward.1} parent=0 // pred_check
    _
  $region3: #{cyclic_classifier_forward.1} parent=0 // pred_check_branch
    %11 = sbr.rel (0) target = $region5
  $region4: #{cyclic_classifier_forward.1} parent=0 // pred_region
    _
  $region5: #{cyclic_classifier_forward.1} parent=0 // pred_fallthru
    _
  // Predicated region
  $region6: #{cyclic_classifier_forward.1} parent=0 // pred_check
    _
  $region7: #{cyclic_classifier_forward.1} parent=0 // pred_check_branch
    %13 = sbr.rel (0) target = $region9
  $region8: #{cyclic_classifier_forward.1} parent=0 // pred_region
    _
  $region9: #{cyclic_classifier_forward.1} parent=0 // pred_fallthru
    _
  // Predicated region
  $region10: #{cyclic_classifier_forward.1} parent=0 // pred_check
    _
  $region11: #{cyclic_classifier_forward.1} parent=0 // pred_check_branch
    %15 = sbr.rel (0) target = $region13
  $region12: #{cyclic_classifier_forward.1} parent=0 // pred_region
    _
  $region13: #{cyclic_classifier_forward.1} parent=0 // pred_fallthru
    _
  // Predicated region
  $region14: #{cyclic_classifier_forward.1} parent=0 // pred_check
    _
  $region15: #{cyclic_classifier_forward.1} parent=0 // pred_check_branch
    %17 = sbr.rel (0) target = $region17
  $region16: #{cyclic_classifier_forward.1} parent=0 // pred_region
    _
  $region17: #{cyclic_classifier_forward.1} parent=0 // pred_fallthru
    _
  %v19 = vld [vmem:[%s0] sm:$0x77]
  %v20 = vld [vmem:[%s0 + $0x8] sm:$0x77]
  %v23 = vcombine.high %v19, %v19
  %v24 = vcombine.high %v20, %v20
  %v27 = vpack.c.bf16 %v19, %v19
  %v28 = vpack.c.bf16 %v23, %v23
  %v29 = vpack.c.bf16 %v20, %v20
  %v30 = vpack.c.bf16 %v24, %v24
  %v31 = vld [vmem:[%s1] sm:$0xf]
  %v32 = vld [vmem:[%s1 + $0x4] sm:$0xf]
  %v33 = vld [vmem:[%s1 + $0x8] sm:$0xf]
  %v34 = vld [vmem:[%s1 + $0xc] sm:$0xf]
  %v35 = vld [vmem:[%s1 + $0x10] sm:$0xf]
  %v36 = vld [vmem:[%s1 + $0x14] sm:$0xf]
  %v37 = vld [vmem:[%s1 + $0x18] sm:$0xf]
  %v38 = vld [vmem:[%s1 + $0x1c] sm:$0xf]
  %v39 = vld [vmem:[%s1 + $0x20] sm:$0xf]
  %v40 = vld [vmem:[%s1 + $0x24] sm:$0xf]
  %v41 = vld [vmem:[%s1 + $0x28] sm:$0xf]
  %v42 = vld [vmem:[%s1 + $0x2c] sm:$0xf]
  %v43 = vld [vmem:[%s1 + $0x30] sm:$0xf]
  %v44 = vld [vmem:[%s2] sm:$0xff]
  %v45 = vld [vmem:[%s2 + $0x8] sm:$0xff]
  %v46 = vld [vmem:[%s2 + $0x10] sm:$0xff]
  %v47 = vld [vmem:[%s2 + $0x18] sm:$0xff]
  %v48 = vld [vmem:[%s2 + $0x20] sm:$0xff]
  %v49 = vld [vmem:[%s2 + $0x28] sm:$0xff]
  %v50 = vld [vmem:[%s2 + $0x30] sm:$0xff]
  %v51 = vld [vmem:[%s2 + $0x38] sm:$0xff]
  %v52 = vld [vmem:[%s2 + $0x40] sm:$0xff]
  %v53 = vld [vmem:[%s2 + $0x48] sm:$0xff]
  %v54 = vld [vmem:[%s2 + $0x50] sm:$0xff]
  %v55 = vld [vmem:[%s2 + $0x58] sm:$0xff]
  %v56 = vld [vmem:[%s2 + $0x60] sm:$0xff]
  %58 = vset.pattern.permute.xlu0 0
  %59 = vperm.xlu0 %58, %v44
  %v60 = vpop.permute.xlu0 %59
  %63 = vset.pattern.permute.xlu0 0
  %64 = vperm.xlu0 %63, %v45
  %v65 = vpop.permute.xlu0 %64
  %68 = vset.pattern.permute.xlu0 0
  %69 = vperm.xlu0 %68, %v46
  %v70 = vpop.permute.xlu0 %69
  %73 = vset.pattern.permute.xlu0 0
  %74 = vperm.xlu0 %73, %v47
  %v75 = vpop.permute.xlu0 %74
  %v81 = vunpack.c.l.b16 %v31
  %v82 = vunpack.c.l.b16 %v32
  %v83 = vunpack.c.l.b16 %v33
  %v84 = vunpack.c.l.b16 %v34
  %v85 = vpack.c.b16 %v82, %v81
  %v86 = vpack.c.b16 %v84, %v83
  %vm87 = vcmask 23552
  %v89 = vsel %vm87, %v85, 0
  %v92 = vsel %vm87, %v86, 0
  %vm94 = vcmask 1040384
  %vm95 = vcmask 1041408
  %v96 = vsel %vm94, 4294967295, 65535
  %v97 = vsel %vm95, %v96, 0
  %v99 = vand.u32 %v27, %v97
  %v102 = vand.u32 %v28, %v97
  %v105 = vand.u32 %v29, %v97
  %v108 = vand.u32 %v30, %v97
  %110 = vmatprep.subr.bf16.mxu0 0
  %111 = vmatpush1.bf16.msra.mxu0 0
  %112 = vmatprep.subr.bf16.mxu0 0
  %113 = vmatpush1.bf16.msra.mxu0 0
  %114 = vmatprep.subr.bf16.mxu0 0
  %115 = vmatpush1.bf16.msra.mxu0 0
  %116 = vmatprep.subr.bf16.mxu0 0
  %117 = vmatpush1.bf16.msra.mxu0 0
  %118 = vmatprep.subr.bf16.mxu0 0
  %119 = vmatpush1.bf16.msra.mxu0 0
  %120 = vmatprep.subr.bf16.mxu0 0
  %121 = vmatpush1.bf16.msra.mxu0 0
  %122 = vmatprep.subr.bf16.mxu0 0
  %123 = vmatpush1.bf16.msra.mxu0 0
  %124 = vmatprep.subr.bf16.mxu0 %v102
  %125 = vmatpush1.bf16.msra.mxu0 %v99
  %126 = vmatprep.subr.bf16.mxu0 0
  %127 = vmatpush2.bf16.msra.mxu0 0
  %128 = vmatprep.subr.bf16.mxu0 0
  %129 = vmatpush2.bf16.msra.mxu0 0
  %130 = vmatprep.subr.bf16.mxu0 0
  %131 = vmatpush2.bf16.msra.mxu0 0
  %132 = vmatprep.subr.bf16.mxu0 0
  %133 = vmatpush2.bf16.msra.mxu0 0
  %134 = vmatprep.subr.bf16.mxu0 0
  %135 = vmatpush2.bf16.msra.mxu0 0
  %136 = vmatprep.subr.bf16.mxu0 0
  %137 = vmatpush2.bf16.msra.mxu0 0
  %138 = vmatprep.subr.bf16.mxu0 0
  %139 = vmatpush2.bf16.msra.mxu0 0
  %140 = vmatprep.subr.bf16.mxu0 0
  %141 = vmatpush2.bf16.msra.mxu0 0
  %142 = vmatprep.mubr.bf16.mxu0 0
  %143 = vmatmul.mubr.bf16.gmra.mxu0 %v89
  %v144 = vpop.f32.mrf.mxu0
  %v145 = vadd.f32 %v60, %v144
  %v146 = vpop.f32.mrf.mxu0
  %v147 = vadd.f32 %v60, %v146
  %v148 = vpop.f32.mrf.mxu0
  %v149 = vadd.f32 %v65, %v148
  %v150 = vpop.f32.mrf.mxu0
  %v151 = vadd.f32 %v65, %v150
  %152 = vmatprep.mubr.bf16.mxu0 0
  %153 = vmatmul.mubr.bf16.gmra.mxu0 %v92
  %v154 = vpop.f32.mrf.mxu0
  %v155 = vadd.f32 %v70, %v154
  %v156 = vpop.f32.mrf.mxu0
  %v157 = vadd.f32 %v70, %v156
  %v158 = vpop.f32.mrf.mxu0
  %v159 = vadd.f32 %v75, %v158
  %v160 = vpop.f32.mrf.mxu0
  %v161 = vadd.f32 %v75, %v160
  %162 = vdwg.mxu0
  %163 = vmatprep.subr.bf16.mxu0 0
  %164 = vmatpush1.bf16.msra.mxu0 0
  %165 = vmatprep.subr.bf16.mxu0 0
  %166 = vmatpush1.bf16.msra.mxu0 0
  %167 = vmatprep.subr.bf16.mxu0 0
  %168 = vmatpush1.bf16.msra.mxu0 0
  %169 = vmatprep.subr.bf16.mxu0 0
  %170 = vmatpush1.bf16.msra.mxu0 0
  %171 = vmatprep.subr.bf16.mxu0 0
  %172 = vmatpush1.bf16.msra.mxu0 0
  %173 = vmatprep.subr.bf16.mxu0 0
  %174 = vmatpush1.bf16.msra.mxu0 0
  %175 = vmatprep.subr.bf16.mxu0 0
  %176 = vmatpush1.bf16.msra.mxu0 0
  %177 = vmatprep.subr.bf16.mxu0 %v108
  %178 = vmatpush1.bf16.msra.mxu0 %v105
  %179 = vmatprep.subr.bf16.mxu0 0
  %180 = vmatpush2.bf16.msra.mxu0 0
  %181 = vmatprep.subr.bf16.mxu0 0
  %182 = vmatpush2.bf16.msra.mxu0 0
  %183 = vmatprep.subr.bf16.mxu0 0
  %184 = vmatpush2.bf16.msra.mxu0 0
  %185 = vmatprep.subr.bf16.mxu0 0
  %186 = vmatpush2.bf16.msra.mxu0 0
  %187 = vmatprep.subr.bf16.mxu0 0
  %188 = vmatpush2.bf16.msra.mxu0 0
  %189 = vmatprep.subr.bf16.mxu0 0
  %190 = vmatpush2.bf16.msra.mxu0 0
  %191 = vmatprep.subr.bf16.mxu0 0
  %192 = vmatpush2.bf16.msra.mxu0 0
  %193 = vmatprep.subr.bf16.mxu0 0
  %194 = vmatpush2.bf16.msra.mxu0 0
  %195 = vmatprep.mubr.bf16.mxu0 0
  %196 = vmatmul.mubr.bf16.gmra.mxu0 %v89
  %v197 = vpop.f32.mrf.mxu0
  %v198 = vadd.f32 %v60, %v197
  %v199 = vpop.f32.mrf.mxu0
  %v200 = vadd.f32 %v60, %v199
  %v201 = vpop.f32.mrf.mxu0
  %v202 = vadd.f32 %v65, %v201
  %v203 = vpop.f32.mrf.mxu0
  %v204 = vadd.f32 %v65, %v203
  %205 = vmatprep.mubr.bf16.mxu0 0
  %206 = vmatmul.mubr.bf16.gmra.mxu0 %v92
  %v207 = vpop.f32.mrf.mxu0
  %v208 = vadd.f32 %v70, %v207
  %v209 = vpop.f32.mrf.mxu0
  %v210 = vadd.f32 %v70, %v209
  %v211 = vpop.f32.mrf.mxu0
  %v212 = vadd.f32 %v75, %v211
  %v213 = vpop.f32.mrf.mxu0
  %v214 = vadd.f32 %v75, %v213
  %215 = vdwg.mxu0
  %vm216 = vcmp.ge.f32.partialorder %v145, 0.0
  %vm217 = vcmp.ge.f32.partialorder %v147, 0.0
  %vm218 = vcmp.ge.f32.partialorder %v198, 0.0
  %vm219 = vcmp.ge.f32.partialorder %v200, 0.0
  %vm220 = vcmp.ge.f32.partialorder %v149, 0.0
  %vm221 = vcmp.ge.f32.partialorder %v151, 0.0
  %vm222 = vcmp.ge.f32.partialorder %v202, 0.0
  %vm223 = vcmp.ge.f32.partialorder %v204, 0.0
  %v224 = vmul.f32 %v145, 0.2
  %v225 = vmul.f32 %v147, 0.2
  %v226 = vmul.f32 %v198, 0.2
  %v227 = vmul.f32 %v200, 0.2
  %v228 = vmul.f32 %v149, 0.2
  %v229 = vmul.f32 %v151, 0.2
  %v230 = vmul.f32 %v202, 0.2
  %v231 = vmul.f32 %v204, 0.2
  %v232 = vsel %vm216, %v145, %v224
  %v233 = vsel %vm217, %v147, %v225
  %v234 = vsel %vm218, %v198, %v226
  %v235 = vsel %vm219, %v200, %v227
  %v236 = vsel %vm220, %v149, %v228
  %v237 = vsel %vm221, %v151, %v229
  %v238 = vsel %vm222, %v202, %v230
  %v239 = vsel %vm223, %v204, %v231
  %v240 = vadd.f32 %v232, %v155
  %v241 = vadd.f32 %v233, %v157
  %v242 = vadd.f32 %v234, %v208
  %v243 = vadd.f32 %v235, %v210
  %v244 = vadd.f32 %v236, %v159
  %v245 = vadd.f32 %v237, %v161
  %v246 = vadd.f32 %v238, %v212
  %v247 = vadd.f32 %v239, %v214
  %v248 = vpack.c.bf16 %v244, %v240
  %v249 = vpack.c.bf16 %v245, %v241
  %v250 = vpack.c.bf16 %v246, %v242
  %v251 = vpack.c.bf16 %v247, %v243
  %253 = vset.pattern.permute.xlu0 0
  %254 = vperm.xlu0 %253, %v48
  %v255 = vpop.permute.xlu0 %254
  %258 = vset.pattern.permute.xlu0 0
  %259 = vperm.xlu0 %258, %v49
  %v260 = vpop.permute.xlu0 %259
  %263 = vset.pattern.permute.xlu0 0
  %264 = vperm.xlu0 %263, %v50
  %v265 = vpop.permute.xlu0 %264
  %268 = vset.pattern.permute.xlu0 0
  %269 = vperm.xlu0 %268, %v51
  %v270 = vpop.permute.xlu0 %269
  %273 = vset.pattern.permute.xlu0 0
  %274 = vperm.xlu0 %273, %v52
  %v275 = vpop.permute.xlu0 %274
  %278 = vset.pattern.permute.xlu0 0
  %279 = vperm.xlu0 %278, %v53
  %v280 = vpop.permute.xlu0 %279
  %v288 = vunpack.c.l.b16 %v35
  %v289 = vunpack.c.l.b16 %v36
  %v290 = vunpack.c.l.b16 %v37
  %v291 = vunpack.c.l.b16 %v38
  %v292 = vunpack.c.l.b16 %v39
  %v293 = vunpack.c.l.b16 %v40
  %v294 = vpack.c.b16 %v289, %v288
  %v295 = vpack.c.b16 %v291, %v290
  %v296 = vpack.c.b16 %v293, %v292
  %vm297 = vcmask 130048
  %v299 = vsel %vm297, %v294, 0
  %v302 = vsel %vm297, %v295, 0
  %v305 = vsel %vm297, %v296, 0
  %307 = vmatprep.subr.bf16.mxu0 0
  %308 = vmatpush1.bf16.msra.mxu0 0
  %309 = vmatprep.subr.bf16.mxu0 0
  %310 = vmatpush1.bf16.msra.mxu0 0
  %311 = vmatprep.subr.bf16.mxu0 0
  %312 = vmatpush1.bf16.msra.mxu0 0
  %313 = vmatprep.subr.bf16.mxu0 0
  %314 = vmatpush1.bf16.msra.mxu0 0
  %315 = vmatprep.subr.bf16.mxu0 0
  %316 = vmatpush1.bf16.msra.mxu0 0
  %317 = vmatprep.subr.bf16.mxu0 0
  %318 = vmatpush1.bf16.msra.mxu0 0
  %319 = vmatprep.subr.bf16.mxu0 0
  %320 = vmatpush1.bf16.msra.mxu0 0
  %321 = vmatprep.subr.bf16.mxu0 %v249
  %322 = vmatpush1.bf16.msra.mxu0 %v248
  %323 = vmatprep.subr.bf16.mxu0 0
  %324 = vmatpush2.bf16.msra.mxu0 0
  %325 = vmatprep.subr.bf16.mxu0 0
  %326 = vmatpush2.bf16.msra.mxu0 0
  %327 = vmatprep.subr.bf16.mxu0 0
  %328 = vmatpush2.bf16.msra.mxu0 0
  %329 = vmatprep.subr.bf16.mxu0 0
  %330 = vmatpush2.bf16.msra.mxu0 0
  %331 = vmatprep.subr.bf16.mxu0 0
  %332 = vmatpush2.bf16.msra.mxu0 0
  %333 = vmatprep.subr.bf16.mxu0 0
  %334 = vmatpush2.bf16.msra.mxu0 0
  %335 = vmatprep.subr.bf16.mxu0 0
  %336 = vmatpush2.bf16.msra.mxu0 0
  %337 = vmatprep.subr.bf16.mxu0 0
  %338 = vmatpush2.bf16.msra.mxu0 0
  %339 = vmatprep.mubr.bf16.mxu0 0
  %340 = vmatmul.mubr.bf16.gmra.mxu0 %v299
  %v341 = vpop.f32.mrf.mxu0
  %v342 = vadd.f32 %v255, %v341
  %v343 = vpop.f32.mrf.mxu0
  %v344 = vadd.f32 %v255, %v343
  %v345 = vpop.f32.mrf.mxu0
  %v346 = vadd.f32 %v260, %v345
  %v347 = vpop.f32.mrf.mxu0
  %v348 = vadd.f32 %v260, %v347
  %349 = vmatprep.mubr.bf16.mxu0 0
  %350 = vmatmul.mubr.bf16.gmra.mxu0 %v302
  %v351 = vpop.f32.mrf.mxu0
  %v352 = vadd.f32 %v265, %v351
  %v353 = vpop.f32.mrf.mxu0
  %v354 = vadd.f32 %v265, %v353
  %v355 = vpop.f32.mrf.mxu0
  %v356 = vadd.f32 %v270, %v355
  %v357 = vpop.f32.mrf.mxu0
  %v358 = vadd.f32 %v270, %v357
  %359 = vmatprep.mubr.bf16.mxu0 0
  %360 = vmatmul.mubr.bf16.gmra.mxu0 %v305
  %v361 = vpop.f32.mrf.mxu0
  %v362 = vadd.f32 %v275, %v361
  %v363 = vpop.f32.mrf.mxu0
  %v364 = vadd.f32 %v275, %v363
  %v365 = vpop.f32.mrf.mxu0
  %v366 = vadd.f32 %v280, %v365
  %v367 = vpop.f32.mrf.mxu0
  %v368 = vadd.f32 %v280, %v367
  %369 = vdwg.mxu0
  %370 = vmatprep.subr.bf16.mxu0 0
  %371 = vmatpush1.bf16.msra.mxu0 0
  %372 = vmatprep.subr.bf16.mxu0 0
  %373 = vmatpush1.bf16.msra.mxu0 0
  %374 = vmatprep.subr.bf16.mxu0 0
  %375 = vmatpush1.bf16.msra.mxu0 0
  %376 = vmatprep.subr.bf16.mxu0 0
  %377 = vmatpush1.bf16.msra.mxu0 0
  %378 = vmatprep.subr.bf16.mxu0 0
  %379 = vmatpush1.bf16.msra.mxu0 0
  %380 = vmatprep.subr.bf16.mxu0 0
  %381 = vmatpush1.bf16.msra.mxu0 0
  %382 = vmatprep.subr.bf16.mxu0 0
  %383 = vmatpush1.bf16.msra.mxu0 0
  %384 = vmatprep.subr.bf16.mxu0 %v251
  %385 = vmatpush1.bf16.msra.mxu0 %v250
  %386 = vmatprep.subr.bf16.mxu0 0
  %387 = vmatpush2.bf16.msra.mxu0 0
  %388 = vmatprep.subr.bf16.mxu0 0
  %389 = vmatpush2.bf16.msra.mxu0 0
  %390 = vmatprep.subr.bf16.mxu0 0
  %391 = vmatpush2.bf16.msra.mxu0 0
  %392 = vmatprep.subr.bf16.mxu0 0
  %393 = vmatpush2.bf16.msra.mxu0 0
  %394 = vmatprep.subr.bf16.mxu0 0
  %395 = vmatpush2.bf16.msra.mxu0 0
  %396 = vmatprep.subr.bf16.mxu0 0
  %397 = vmatpush2.bf16.msra.mxu0 0
  %398 = vmatprep.subr.bf16.mxu0 0
  %399 = vmatpush2.bf16.msra.mxu0 0
  %400 = vmatprep.subr.bf16.mxu0 0
  %401 = vmatpush2.bf16.msra.mxu0 0
  %402 = vmatprep.mubr.bf16.mxu0 0
  %403 = vmatmul.mubr.bf16.gmra.mxu0 %v299
  %v404 = vpop.f32.mrf.mxu0
  %v405 = vadd.f32 %v255, %v404
  %v406 = vpop.f32.mrf.mxu0
  %v407 = vadd.f32 %v255, %v406
  %v408 = vpop.f32.mrf.mxu0
  %v409 = vadd.f32 %v260, %v408
  %v410 = vpop.f32.mrf.mxu0
  %v411 = vadd.f32 %v260, %v410
  %412 = vmatprep.mubr.bf16.mxu0 0
  %413 = vmatmul.mubr.bf16.gmra.mxu0 %v302
  %v414 = vpop.f32.mrf.mxu0
  %v415 = vadd.f32 %v265, %v414
  %v416 = vpop.f32.mrf.mxu0
  %v417 = vadd.f32 %v265, %v416
  %v418 = vpop.f32.mrf.mxu0
  %v419 = vadd.f32 %v270, %v418
  %v420 = vpop.f32.mrf.mxu0
  %v421 = vadd.f32 %v270, %v420
  %422 = vmatprep.mubr.bf16.mxu0 0
  %423 = vmatmul.mubr.bf16.gmra.mxu0 %v305
  %v424 = vpop.f32.mrf.mxu0
  %v425 = vadd.f32 %v275, %v424
  %v426 = vpop.f32.mrf.mxu0
  %v427 = vadd.f32 %v275, %v426
  %v428 = vpop.f32.mrf.mxu0
  %v429 = vadd.f32 %v280, %v428
  %v430 = vpop.f32.mrf.mxu0
  %v431 = vadd.f32 %v280, %v430
  %432 = vdwg.mxu0
  %v433 = vpack.c.bf16 %v366, %v362
  %v434 = vpack.c.bf16 %v368, %v364
  %v435 = vpack.c.bf16 %v429, %v425
  %v436 = vpack.c.bf16 %v431, %v427
  %s437 = sld [smem:[#allocation2]]
  %v438 = vmul.f32 %v342, %v342
  %v439 = vmul.f32 %v344, %v344
  %v440 = vmul.f32 %v346, %v346
  %v441 = vmul.f32 %v348, %v348
  %v442 = vadd.f32 %v438, %v439
  %443 = vadd.xlane.f32.xlu0 %v442
  %v444 = vpop.xlane.xlu0 %443
  %v445 = vadd.f32 %v440, %v441
  %446 = vadd.xlane.f32.xlu0 %v445
  %v447 = vpop.xlane.xlu0 %446
  %v448 = vadd.f32 %v444, 1e-06
  %v449 = vadd.f32 %v447, 1e-06
  %v450 = vrsqrt.pop %v448
  %v451 = vrsqrt.pop %v449
  %v452 = vmul.f32 %v342, %v450
  %v453 = vmul.f32 %v344, %v450
  %v454 = vmul.f32 %v346, %v451
  %v455 = vmul.f32 %v348, %v451
  %v456 = vmul.f32 %v352, %v352
  %v457 = vmul.f32 %v354, %v354
  %v458 = vmul.f32 %v356, %v356
  %v459 = vmul.f32 %v358, %v358
  %v460 = vadd.f32 %v456, %v457
  %461 = vadd.xlane.f32.xlu0 %v460
  %v462 = vpop.xlane.xlu0 %461
  %v463 = vadd.f32 %v458, %v459
  %464 = vadd.xlane.f32.xlu0 %v463
  %v465 = vpop.xlane.xlu0 %464
  %v466 = vadd.f32 %v462, 1e-06
  %v467 = vadd.f32 %v465, 1e-06
  %v468 = vrsqrt.pop %v466
  %v469 = vrsqrt.pop %v467
  %v470 = vmul.f32 %v352, %v468
  %v471 = vmul.f32 %v354, %v468
  %v472 = vmul.f32 %v356, %v469
  %v473 = vmul.f32 %v358, %v469
  %v474 = vpack.c.bf16 %v454, %v452
  %v475 = vpack.c.bf16 %v455, %v453
  %v476 = vpack.c.bf16 %v472, %v470
  %v477 = vpack.c.bf16 %v473, %v471
  %478 = vmatprep.subr.bf16.mxu0 0
  %479 = vmatpush1.bf16.xpose.msra.mxu0 0
  %480 = vmatprep.subr.bf16.mxu0 0
  %481 = vmatpush1.bf16.xpose.msra.mxu0 0
  %482 = vmatprep.subr.bf16.mxu0 0
  %483 = vmatpush1.bf16.xpose.msra.mxu0 0
  %484 = vmatprep.subr.bf16.mxu0 0
  %485 = vmatpush1.bf16.xpose.msra.mxu0 0
  %486 = vmatprep.subr.bf16.mxu0 0
  %487 = vmatpush1.bf16.xpose.msra.mxu0 0
  %488 = vmatprep.subr.bf16.mxu0 0
  %489 = vmatpush1.bf16.xpose.msra.mxu0 0
  %490 = vmatprep.subr.bf16.mxu0 0
  %491 = vmatpush1.bf16.xpose.msra.mxu0 0
  %492 = vmatprep.subr.bf16.mxu0 %v477
  %493 = vmatpush1.bf16.xpose.msra.mxu0 %v476
  %494 = vmatprep.subr.bf16.mxu0 0
  %495 = vmatpush2.bf16.xpose.msra.mxu0 0
  %496 = vmatprep.subr.bf16.mxu0 0
  %497 = vmatpush2.bf16.xpose.msra.mxu0 0
  %498 = vmatprep.subr.bf16.mxu0 0
  %499 = vmatpush2.bf16.xpose.msra.mxu0 0
  %500 = vmatprep.subr.bf16.mxu0 0
  %501 = vmatpush2.bf16.xpose.msra.mxu0 0
  %502 = vmatprep.subr.bf16.mxu0 0
  %503 = vmatpush2.bf16.xpose.msra.mxu0 0
  %504 = vmatprep.subr.bf16.mxu0 0
  %505 = vmatpush2.bf16.xpose.msra.mxu0 0
  %506 = vmatprep.subr.bf16.mxu0 0
  %507 = vmatpush2.bf16.xpose.msra.mxu0 0
  %508 = vmatprep.subr.bf16.mxu0 0
  %509 = vmatpush2.bf16.xpose.msra.mxu0 0
  %510 = vmatprep.mubr.bf16.mxu0 %v475
  %511 = vmatmul.mubr.bf16.gmra.mxu0 %v474
  %v512 = vpop.f32.mrf.mxu0
  %v513 = vadd.f32 0.0, %v512
  %v514 = vpop.f32.mrf.mxu0
  %v515 = vpop.f32.mrf.mxu0
  %v516 = vadd.f32 0.0, %v515
  %v517 = vpop.f32.mrf.mxu0
  %518 = vdwg.mxu0
  %v519 = vstv %s437
  %v520 = vmul.f32 %v513, %v519
  %v521 = vmul.f32 %v516, %v519
  %v522 = vsel %vm297, %v520, -inf
  %523 = vmax.xlane.f32.xlu0 %v522
  %v524 = vpop.xlane.xlu0 %523
  %v525 = vsel %vm297, %v521, -inf
  %526 = vmax.xlane.f32.xlu0 %v525
  %v527 = vpop.xlane.xlu0 %526
  %v528 = vsub.f32 %v520, %v524
  %v529 = vsub.f32 %v521, %v527
  %v530 = vmul.f32 %v528, 1.442695
  %v531 = vpow.pop %v530
  %v532 = vmul.f32 %v529, 1.442695
  %v533 = vpow.pop %v532
  %v534 = vsel %vm297, %v531, 0.0
  %535 = vadd.xlane.f32.xlu0 %v534
  %v536 = vpop.xlane.xlu0 %535
  %v537 = vsel %vm297, %v533, 0.0
  %538 = vadd.xlane.f32.xlu0 %v537
  %v539 = vpop.xlane.xlu0 %538
  %v540 = vadd.f32 %v536, 1e-06
  %v541 = vadd.f32 %v539, 1e-06
  %v542 = vrcp.pop %v540
  %v543 = vrcp.pop %v541
  %v544 = vmul.f32 %v531, %v542
  %v545 = vmul.f32 %v533, %v543
  %v546 = vpack.c.bf16 %v545, %v544
  %v548 = vsel %vm297, %v546, 0
  %550 = vmatprep.subr.bf16.mxu0 0
  %551 = vmatpush1.bf16.msra.mxu0 0
  %552 = vmatprep.subr.bf16.mxu0 0
  %553 = vmatpush1.bf16.msra.mxu0 0
  %554 = vmatprep.subr.bf16.mxu0 0
  %555 = vmatpush1.bf16.msra.mxu0 0
  %556 = vmatprep.subr.bf16.mxu0 0
  %557 = vmatpush1.bf16.msra.mxu0 0
  %558 = vmatprep.subr.bf16.mxu0 0
  %559 = vmatpush1.bf16.msra.mxu0 0
  %560 = vmatprep.subr.bf16.mxu0 0
  %561 = vmatpush1.bf16.msra.mxu0 0
  %562 = vmatprep.subr.bf16.mxu0 0
  %563 = vmatpush1.bf16.msra.mxu0 0
  %564 = vmatprep.subr.bf16.mxu0 %v434
  %565 = vmatpush1.bf16.msra.mxu0 %v433
  %566 = vmatprep.subr.bf16.mxu0 0
  %567 = vmatpush2.bf16.msra.mxu0 0
  %568 = vmatprep.subr.bf16.mxu0 0
  %569 = vmatpush2.bf16.msra.mxu0 0
  %570 = vmatprep.subr.bf16.mxu0 0
  %571 = vmatpush2.bf16.msra.mxu0 0
  %572 = vmatprep.subr.bf16.mxu0 0
  %573 = vmatpush2.bf16.msra.mxu0 0
  %574 = vmatprep.subr.bf16.mxu0 0
  %575 = vmatpush2.bf16.msra.mxu0 0
  %576 = vmatprep.subr.bf16.mxu0 0
  %577 = vmatpush2.bf16.msra.mxu0 0
  %578 = vmatprep.subr.bf16.mxu0 0
  %579 = vmatpush2.bf16.msra.mxu0 0
  %580 = vmatprep.subr.bf16.mxu0 0
  %581 = vmatpush2.bf16.msra.mxu0 0
  %582 = vmatprep.mubr.bf16.mxu0 0
  %583 = vmatmul.mubr.bf16.gmra.mxu0 %v548
  %v584 = vpop.f32.mrf.mxu0
  %v585 = vadd.f32 0.0, %v584
  %v586 = vpop.f32.mrf.mxu0
  %v587 = vadd.f32 0.0, %v586
  %v588 = vpop.f32.mrf.mxu0
  %v589 = vadd.f32 0.0, %v588
  %v590 = vpop.f32.mrf.mxu0
  %v591 = vadd.f32 0.0, %v590
  %592 = vdwg.mxu0
  %v593 = vmul.f32 %v405, %v405
  %v594 = vmul.f32 %v407, %v407
  %v595 = vmul.f32 %v409, %v409
  %v596 = vmul.f32 %v411, %v411
  %v597 = vadd.f32 %v593, %v594
  %598 = vadd.xlane.f32.xlu0 %v597
  %v599 = vpop.xlane.xlu0 %598
  %v600 = vadd.f32 %v595, %v596
  %601 = vadd.xlane.f32.xlu0 %v600
  %v602 = vpop.xlane.xlu0 %601
  %v603 = vadd.f32 %v599, 1e-06
  %v604 = vadd.f32 %v602, 1e-06
  %v605 = vrsqrt.pop %v603
  %v606 = vrsqrt.pop %v604
  %v607 = vmul.f32 %v405, %v605
  %v608 = vmul.f32 %v407, %v605
  %v609 = vmul.f32 %v409, %v606
  %v610 = vmul.f32 %v411, %v606
  %v611 = vmul.f32 %v415, %v415
  %v612 = vmul.f32 %v417, %v417
  %v613 = vmul.f32 %v419, %v419
  %v614 = vmul.f32 %v421, %v421
  %v615 = vadd.f32 %v611, %v612
  %616 = vadd.xlane.f32.xlu0 %v615
  %v617 = vpop.xlane.xlu0 %616
  %v618 = vadd.f32 %v613, %v614
  %619 = vadd.xlane.f32.xlu0 %v618
  %v620 = vpop.xlane.xlu0 %619
  %v621 = vadd.f32 %v617, 1e-06
  %v622 = vadd.f32 %v620, 1e-06
  %v623 = vrsqrt.pop %v621
  %v624 = vrsqrt.pop %v622
  %v625 = vmul.f32 %v415, %v623
  %v626 = vmul.f32 %v417, %v623
  %v627 = vmul.f32 %v419, %v624
  %v628 = vmul.f32 %v421, %v624
  %v629 = vpack.c.bf16 %v609, %v607
  %v630 = vpack.c.bf16 %v610, %v608
  %v631 = vpack.c.bf16 %v627, %v625
  %v632 = vpack.c.bf16 %v628, %v626
  %633 = vmatprep.subr.bf16.mxu0 0
  %634 = vmatpush1.bf16.xpose.msra.mxu0 0
  %635 = vmatprep.subr.bf16.mxu0 0
  %636 = vmatpush1.bf16.xpose.msra.mxu0 0
  %637 = vmatprep.subr.bf16.mxu0 0
  %638 = vmatpush1.bf16.xpose.msra.mxu0 0
  %639 = vmatprep.subr.bf16.mxu0 0
  %640 = vmatpush1.bf16.xpose.msra.mxu0 0
  %641 = vmatprep.subr.bf16.mxu0 0
  %642 = vmatpush1.bf16.xpose.msra.mxu0 0
  %643 = vmatprep.subr.bf16.mxu0 0
  %644 = vmatpush1.bf16.xpose.msra.mxu0 0
  %645 = vmatprep.subr.bf16.mxu0 0
  %646 = vmatpush1.bf16.xpose.msra.mxu0 0
  %647 = vmatprep.subr.bf16.mxu0 %v632
  %648 = vmatpush1.bf16.xpose.msra.mxu0 %v631
  %649 = vmatprep.subr.bf16.mxu0 0
  %650 = vmatpush2.bf16.xpose.msra.mxu0 0
  %651 = vmatprep.subr.bf16.mxu0 0
  %652 = vmatpush2.bf16.xpose.msra.mxu0 0
  %653 = vmatprep.subr.bf16.mxu0 0
  %654 = vmatpush2.bf16.xpose.msra.mxu0 0
  %655 = vmatprep.subr.bf16.mxu0 0
  %656 = vmatpush2.bf16.xpose.msra.mxu0 0
  %657 = vmatprep.subr.bf16.mxu0 0
  %658 = vmatpush2.bf16.xpose.msra.mxu0 0
  %659 = vmatprep.subr.bf16.mxu0 0
  %660 = vmatpush2.bf16.xpose.msra.mxu0 0
  %661 = vmatprep.subr.bf16.mxu0 0
  %662 = vmatpush2.bf16.xpose.msra.mxu0 0
  %663 = vmatprep.subr.bf16.mxu0 0
  %664 = vmatpush2.bf16.xpose.msra.mxu0 0
  %665 = vmatprep.mubr.bf16.mxu0 %v630
  %666 = vmatmul.mubr.bf16.gmra.mxu0 %v629
  %v667 = vpop.f32.mrf.mxu0
  %v668 = vadd.f32 0.0, %v667
  %v669 = vpop.f32.mrf.mxu0
  %v670 = vpop.f32.mrf.mxu0
  %v671 = vadd.f32 0.0, %v670
  %v672 = vpop.f32.mrf.mxu0
  %673 = vdwg.mxu0
  %v674 = vmul.f32 %v668, %v519
  %v675 = vmul.f32 %v671, %v519
  %v676 = vsel %vm297, %v674, -inf
  %677 = vmax.xlane.f32.xlu0 %v676
  %v678 = vpop.xlane.xlu0 %677
  %v679 = vsel %vm297, %v675, -inf
  %680 = vmax.xlane.f32.xlu0 %v679
  %v681 = vpop.xlane.xlu0 %680
  %v682 = vsub.f32 %v674, %v678
  %v683 = vsub.f32 %v675, %v681
  %v684 = vmul.f32 %v682, 1.442695
  %v685 = vpow.pop %v684
  %v686 = vmul.f32 %v683, 1.442695
  %v687 = vpow.pop %v686
  %v688 = vsel %vm297, %v685, 0.0
  %689 = vadd.xlane.f32.xlu0 %v688
  %v690 = vpop.xlane.xlu0 %689
  %v691 = vsel %vm297, %v687, 0.0
  %692 = vadd.xlane.f32.xlu0 %v691
  %v693 = vpop.xlane.xlu0 %692
  %v694 = vadd.f32 %v690, 1e-06
  %v695 = vadd.f32 %v693, 1e-06
  %v696 = vrcp.pop %v694
  %v697 = vrcp.pop %v695
  %v698 = vmul.f32 %v685, %v696
  %v699 = vmul.f32 %v687, %v697
  %v700 = vpack.c.bf16 %v699, %v698
  %v702 = vsel %vm297, %v700, 0
  %704 = vmatprep.subr.bf16.mxu0 0
  %705 = vmatpush1.bf16.msra.mxu0 0
  %706 = vmatprep.subr.bf16.mxu0 0
  %707 = vmatpush1.bf16.msra.mxu0 0
  %708 = vmatprep.subr.bf16.mxu0 0
  %709 = vmatpush1.bf16.msra.mxu0 0
  %710 = vmatprep.subr.bf16.mxu0 0
  %711 = vmatpush1.bf16.msra.mxu0 0
  %712 = vmatprep.subr.bf16.mxu0 0
  %713 = vmatpush1.bf16.msra.mxu0 0
  %714 = vmatprep.subr.bf16.mxu0 0
  %715 = vmatpush1.bf16.msra.mxu0 0
  %716 = vmatprep.subr.bf16.mxu0 0
  %717 = vmatpush1.bf16.msra.mxu0 0
  %718 = vmatprep.subr.bf16.mxu0 %v436
  %719 = vmatpush1.bf16.msra.mxu0 %v435
  %720 = vmatprep.subr.bf16.mxu0 0
  %721 = vmatpush2.bf16.msra.mxu0 0
  %722 = vmatprep.subr.bf16.mxu0 0
  %723 = vmatpush2.bf16.msra.mxu0 0
  %724 = vmatprep.subr.bf16.mxu0 0
  %725 = vmatpush2.bf16.msra.mxu0 0
  %726 = vmatprep.subr.bf16.mxu0 0
  %727 = vmatpush2.bf16.msra.mxu0 0
  %728 = vmatprep.subr.bf16.mxu0 0
  %729 = vmatpush2.bf16.msra.mxu0 0
  %730 = vmatprep.subr.bf16.mxu0 0
  %731 = vmatpush2.bf16.msra.mxu0 0
  %732 = vmatprep.subr.bf16.mxu0 0
  %733 = vmatpush2.bf16.msra.mxu0 0
  %734 = vmatprep.subr.bf16.mxu0 0
  %735 = vmatpush2.bf16.msra.mxu0 0
  %736 = vmatprep.mubr.bf16.mxu0 0
  %737 = vmatmul.mubr.bf16.gmra.mxu0 %v702
  %v738 = vpop.f32.mrf.mxu0
  %v739 = vadd.f32 0.0, %v738
  %v740 = vpop.f32.mrf.mxu0
  %v741 = vadd.f32 0.0, %v740
  %v742 = vpop.f32.mrf.mxu0
  %v743 = vadd.f32 0.0, %v742
  %v744 = vpop.f32.mrf.mxu0
  %v745 = vadd.f32 0.0, %v744
  %746 = vdwg.mxu0
  %v747 = vpack.c.bf16 %v589, %v585
  %v748 = vpack.c.bf16 %v591, %v587
  %v749 = vpack.c.bf16 %v743, %v739
  %v750 = vpack.c.bf16 %v745, %v741
  %v753 = vunpack.c.l.b16 %v41
  %v754 = vunpack.c.l.b16 %v42
  %v755 = vpack.c.b16 %v754, %v753
  %v757 = vsel %vm297, %v755, 0
  %759 = vmatprep.subr.bf16.mxu0 0
  %760 = vmatpush1.bf16.msra.mxu0 0
  %761 = vmatprep.subr.bf16.mxu0 0
  %762 = vmatpush1.bf16.msra.mxu0 0
  %763 = vmatprep.subr.bf16.mxu0 0
  %764 = vmatpush1.bf16.msra.mxu0 0
  %765 = vmatprep.subr.bf16.mxu0 0
  %766 = vmatpush1.bf16.msra.mxu0 0
  %767 = vmatprep.subr.bf16.mxu0 0
  %768 = vmatpush1.bf16.msra.mxu0 0
  %769 = vmatprep.subr.bf16.mxu0 0
  %770 = vmatpush1.bf16.msra.mxu0 0
  %771 = vmatprep.subr.bf16.mxu0 0
  %772 = vmatpush1.bf16.msra.mxu0 0
  %773 = vmatprep.subr.bf16.mxu0 %v748
  %774 = vmatpush1.bf16.msra.mxu0 %v747
  %775 = vmatprep.subr.bf16.mxu0 0
  %776 = vmatpush2.bf16.msra.mxu0 0
  %777 = vmatprep.subr.bf16.mxu0 0
  %778 = vmatpush2.bf16.msra.mxu0 0
  %779 = vmatprep.subr.bf16.mxu0 0
  %780 = vmatpush2.bf16.msra.mxu0 0
  %781 = vmatprep.subr.bf16.mxu0 0
  %782 = vmatpush2.bf16.msra.mxu0 0
  %783 = vmatprep.subr.bf16.mxu0 0
  %784 = vmatpush2.bf16.msra.mxu0 0
  %785 = vmatprep.subr.bf16.mxu0 0
  %786 = vmatpush2.bf16.msra.mxu0 0
  %787 = vmatprep.subr.bf16.mxu0 0
  %788 = vmatpush2.bf16.msra.mxu0 0
  %789 = vmatprep.subr.bf16.mxu0 0
  %790 = vmatpush2.bf16.msra.mxu0 0
  %791 = vmatprep.mubr.bf16.mxu0 0
  %792 = vmatmul.mubr.bf16.gmra.mxu0 %v757
  %v793 = vpop.f32.mrf.mxu0
  %v794 = vadd.f32 0.0, %v793
  %v795 = vpop.f32.mrf.mxu0
  %v796 = vadd.f32 0.0, %v795
  %v797 = vpop.f32.mrf.mxu0
  %v798 = vadd.f32 0.0, %v797
  %v799 = vpop.f32.mrf.mxu0
  %v800 = vadd.f32 0.0, %v799
  %801 = vdwg.mxu0
  %802 = vmatprep.subr.bf16.mxu0 0
  %803 = vmatpush1.bf16.msra.mxu0 0
  %804 = vmatprep.subr.bf16.mxu0 0
  %805 = vmatpush1.bf16.msra.mxu0 0
  %806 = vmatprep.subr.bf16.mxu0 0
  %807 = vmatpush1.bf16.msra.mxu0 0
  %808 = vmatprep.subr.bf16.mxu0 0
  %809 = vmatpush1.bf16.msra.mxu0 0
  %810 = vmatprep.subr.bf16.mxu0 0
  %811 = vmatpush1.bf16.msra.mxu0 0
  %812 = vmatprep.subr.bf16.mxu0 0
  %813 = vmatpush1.bf16.msra.mxu0 0
  %814 = vmatprep.subr.bf16.mxu0 0
  %815 = vmatpush1.bf16.msra.mxu0 0
  %816 = vmatprep.subr.bf16.mxu0 %v750
  %817 = vmatpush1.bf16.msra.mxu0 %v749
  %818 = vmatprep.subr.bf16.mxu0 0
  %819 = vmatpush2.bf16.msra.mxu0 0
  %820 = vmatprep.subr.bf16.mxu0 0
  %821 = vmatpush2.bf16.msra.mxu0 0
  %822 = vmatprep.subr.bf16.mxu0 0
  %823 = vmatpush2.bf16.msra.mxu0 0
  %824 = vmatprep.subr.bf16.mxu0 0
  %825 = vmatpush2.bf16.msra.mxu0 0
  %826 = vmatprep.subr.bf16.mxu0 0
  %827 = vmatpush2.bf16.msra.mxu0 0
  %828 = vmatprep.subr.bf16.mxu0 0
  %829 = vmatpush2.bf16.msra.mxu0 0
  %830 = vmatprep.subr.bf16.mxu0 0
  %831 = vmatpush2.bf16.msra.mxu0 0
  %832 = vmatprep.subr.bf16.mxu0 0
  %833 = vmatpush2.bf16.msra.mxu0 0
  %834 = vmatprep.mubr.bf16.mxu0 0
  %835 = vmatmul.mubr.bf16.gmra.mxu0 %v757
  %v836 = vpop.f32.mrf.mxu0
  %v837 = vadd.f32 0.0, %v836
  %v838 = vpop.f32.mrf.mxu0
  %v839 = vadd.f32 0.0, %v838
  %v840 = vpop.f32.mrf.mxu0
  %v841 = vadd.f32 0.0, %v840
  %v842 = vpop.f32.mrf.mxu0
  %v843 = vadd.f32 0.0, %v842
  %844 = vdwg.mxu0
  %v845 = vadd.f32 %v240, %v794
  %v846 = vadd.f32 %v241, %v796
  %v847 = vadd.f32 %v242, %v837
  %v848 = vadd.f32 %v243, %v839
  %v849 = vadd.f32 %v244, %v798
  %v850 = vadd.f32 %v245, %v800
  %v851 = vadd.f32 %v246, %v841
  %v852 = vadd.f32 %v247, %v843
  %854 = vset.pattern.permute.xlu0 0
  %855 = vperm.xlu0 %854, %v54
  %v856 = vpop.permute.xlu0 %855
  %859 = vset.pattern.permute.xlu0 0
  %860 = vperm.xlu0 %859, %v55
  %v861 = vpop.permute.xlu0 %860
  %v863 = vadd.f32 %v845, %v856
  %v864 = vadd.f32 %v846, %v856
  %v865 = vadd.f32 %v847, %v856
  %v866 = vadd.f32 %v848, %v856
  %v867 = vadd.f32 %v849, %v861
  %v868 = vadd.f32 %v850, %v861
  %v869 = vadd.f32 %v851, %v861
  %v870 = vadd.f32 %v852, %v861
  %v871 = vpack.c.bf16 %v867, %v863
  %v872 = vpack.c.bf16 %v868, %v864
  %v873 = vpack.c.bf16 %v869, %v865
  %v874 = vpack.c.bf16 %v870, %v866
  %876 = vset.pattern.permute.xlu0 0
  %877 = vperm.xlu0 %876, %v56
  %v878 = vpop.permute.xlu0 %877
  %v881 = vsel %vm297, %v43, 0
  %883 = vmatprep.subr.bf16.mxu0 0
  %884 = vmatpush1.bf16.msra.mxu0 0
  %885 = vmatprep.subr.bf16.mxu0 0
  %886 = vmatpush1.bf16.msra.mxu0 0
  %887 = vmatprep.subr.bf16.mxu0 0
  %888 = vmatpush1.bf16.msra.mxu0 0
  %889 = vmatprep.subr.bf16.mxu0 0
  %890 = vmatpush1.bf16.msra.mxu0 0
  %891 = vmatprep.subr.bf16.mxu0 0
  %892 = vmatpush1.bf16.msra.mxu0 0
  %893 = vmatprep.subr.bf16.mxu0 0
  %894 = vmatpush1.bf16.msra.mxu0 0
  %895 = vmatprep.subr.bf16.mxu0 0
  %896 = vmatpush1.bf16.msra.mxu0 0
  %897 = vmatprep.subr.bf16.mxu0 %v872
  %898 = vmatpush1.bf16.msra.mxu0 %v871
  %899 = vmatprep.subr.bf16.mxu0 0
  %900 = vmatpush2.bf16.msra.mxu0 0
  %901 = vmatprep.subr.bf16.mxu0 0
  %902 = vmatpush2.bf16.msra.mxu0 0
  %903 = vmatprep.subr.bf16.mxu0 0
  %904 = vmatpush2.bf16.msra.mxu0 0
  %905 = vmatprep.subr.bf16.mxu0 0
  %906 = vmatpush2.bf16.msra.mxu0 0
  %907 = vmatprep.subr.bf16.mxu0 0
  %908 = vmatpush2.bf16.msra.mxu0 0
  %909 = vmatprep.subr.bf16.mxu0 0
  %910 = vmatpush2.bf16.msra.mxu0 0
  %911 = vmatprep.subr.bf16.mxu0 0
  %912 = vmatpush2.bf16.msra.mxu0 0
  %913 = vmatprep.subr.bf16.mxu0 0
  %914 = vmatpush2.bf16.msra.mxu0 0
  %915 = vmatprep.mubr.bf16.mxu0 0
  %916 = vmatmul.mubr.bf16.gmra.mxu0 %v881
  %v917 = vpop.f32.mrf.mxu0
  %v918 = vadd.f32 %v878, %v917
  %v919 = vpop.f32.mrf.mxu0
  %v920 = vadd.f32 %v878, %v919
  %v921 = vpop.f32.mrf.mxu0
  %v922 = vpop.f32.mrf.mxu0
  %923 = vdwg.mxu0
  %924 = vmatprep.subr.bf16.mxu0 0
  %925 = vmatpush1.bf16.msra.mxu0 0
  %926 = vmatprep.subr.bf16.mxu0 0
  %927 = vmatpush1.bf16.msra.mxu0 0
  %928 = vmatprep.subr.bf16.mxu0 0
  %929 = vmatpush1.bf16.msra.mxu0 0
  %930 = vmatprep.subr.bf16.mxu0 0
  %931 = vmatpush1.bf16.msra.mxu0 0
  %932 = vmatprep.subr.bf16.mxu0 0
  %933 = vmatpush1.bf16.msra.mxu0 0
  %934 = vmatprep.subr.bf16.mxu0 0
  %935 = vmatpush1.bf16.msra.mxu0 0
  %936 = vmatprep.subr.bf16.mxu0 0
  %937 = vmatpush1.bf16.msra.mxu0 0
  %938 = vmatprep.subr.bf16.mxu0 %v874
  %939 = vmatpush1.bf16.msra.mxu0 %v873
  %940 = vmatprep.subr.bf16.mxu0 0
  %941 = vmatpush2.bf16.msra.mxu0 0
  %942 = vmatprep.subr.bf16.mxu0 0
  %943 = vmatpush2.bf16.msra.mxu0 0
  %944 = vmatprep.subr.bf16.mxu0 0
  %945 = vmatpush2.bf16.msra.mxu0 0
  %946 = vmatprep.subr.bf16.mxu0 0
  %947 = vmatpush2.bf16.msra.mxu0 0
  %948 = vmatprep.subr.bf16.mxu0 0
  %949 = vmatpush2.bf16.msra.mxu0 0
  %950 = vmatprep.subr.bf16.mxu0 0
  %951 = vmatpush2.bf16.msra.mxu0 0
  %952 = vmatprep.subr.bf16.mxu0 0
  %953 = vmatpush2.bf16.msra.mxu0 0
  %954 = vmatprep.subr.bf16.mxu0 0
  %955 = vmatpush2.bf16.msra.mxu0 0
  %956 = vmatprep.mubr.bf16.mxu0 0
  %957 = vmatmul.mubr.bf16.gmra.mxu0 %v881
  %v958 = vpop.f32.mrf.mxu0
  %v959 = vadd.f32 %v878, %v958
  %v960 = vpop.f32.mrf.mxu0
  %v961 = vadd.f32 %v878, %v960
  %v962 = vpop.f32.mrf.mxu0
  %v963 = vpop.f32.mrf.mxu0
  %964 = vdwg.mxu0
  %v965 = vadd.f32 %v918, %v19
  %v966 = vadd.f32 %v920, %v23
  %v967 = vadd.f32 %v959, %v20
  %v968 = vadd.f32 %v961, %v24
  %v973 = vcombine.low %v965, %v966
  %v974 = vcombine.low %v967, %v968
  %977 = vst [vmem:[%s4] sm:$0x77] %v973
  %978 = vst [vmem:[%s4 + $0x8] sm:$0x77] %v974
  // Predicated region
  $region18: #{cyclic_classifier_forward.1} parent=0 // pred_check
    _
  $region19: #{cyclic_classifier_forward.1} parent=0 // pred_check_branch
    %980 = sbr.rel (0) target = $region21
  $region20: #{cyclic_classifier_forward.1} parent=0 // pred_region
    _
  $region21: #{cyclic_classifier_forward.1} parent=0 // pred_fallthru
    _
  // Predicated region
  $region22: #{cyclic_classifier_forward.1} parent=0 // pred_check
    _
  $region23: #{cyclic_classifier_forward.1} parent=0 // pred_check_branch
    %982 = sbr.rel (0) target = $region25
  $region24: #{cyclic_classifier_forward.1} parent=0 // pred_region
    _
  $region25: #{cyclic_classifier_forward.1} parent=0 // pred_fallthru
    _

</llo_original>
